<compile_context>
chip_gen: v7x
topology: tpu7x:2x2x1
jax: 0.10.0
libtpu: 0.0.40
codegen_flags: <defaults>
</compile_context>

<pallas_src>
import functools

import numpy as np
import jax
import jax.numpy as jnp
from jax.experimental import pallas as pl
from jax.experimental.pallas import tpu as pltpu

LANES = 128      # vreg lane width
SUBLANES = 8     # vreg sublane count (f32)


# ---------------------------------------------------------------------------
# Pallas kernel: lane-dense softplus (EUP) + two packed MXU passes + exp (EUP)
# ---------------------------------------------------------------------------
def _tree_kernel(xp_ref, ql_ref, qs_ref, out_ref):
    """One batch tile, batch-packed lane-dense layout.

    xp_ref : [R, 128]       R packed rows; each row = PACK batch elems x F feats
    ql_ref : [128, PACK*L]  block-diagonal kron(I_PACK, Q_left)   (constant)
    qs_ref : [128, PACK*L]  block-diagonal kron(I_PACK, Q_sum)    (constant)
    out_ref: [R, PACK*L]    mu, packed PACK batch elems x L leaves per row
    """
    z = xp_ref[...].astype(jnp.float32)                       # lane-dense [R, 128]
    # Stable softplus(z) = max(z, 0) + log(1 + exp(-|z|)); the log(1+x) form is
    # used (vs log1p) to stay inside the guaranteed Mosaic elementwise set; the
    # lost tail for large |z| is < 6e-8 absolute in log-space (benign here).
    sp = jnp.maximum(z, 0.0) + jnp.log(1.0 + jnp.exp(-jnp.abs(z)))
    # log mu = z @ Q_left - softplus(z) @ Q_sum : fuses the static feature
    # gather and the tree-path product in two MXU passes (no concat).
    log_mu = (jnp.dot(z, ql_ref[...], preferred_element_type=jnp.float32)
              - jnp.dot(sp, qs_ref[...], preferred_element_type=jnp.float32))
    out_ref[...] = jnp.exp(log_mu)                             # [R, PACK*L]


def _pick_block_rows(rows, max_rows):
    """Largest multiple-of-8 divisor of `rows` <= max_rows; prefer >= 2 steps."""
    best = SUBLANES
    d = SUBLANES
    top = min(rows, max_rows)
    while d <= top:
        if rows % d == 0:
            best = d
        d += SUBLANES
    # If everything fit in one step, split in two so both v7x TensorCores and
    # the DMA/compute pipeline have work (when divisibility allows).
    if best == rows and rows % (2 * SUBLANES) == 0:
        best = rows // 2
    return best


def tree_forward(x, ql_packed, qs_packed, n_leaf, *, max_block_rows=1024):
    """x: [B, F] float; packed routing constants [128, PACK*n_leaf]. -> mu [B, n_leaf]."""
    B, F = x.shape
    assert LANES % F == 0, "features4tree must divide 128 for the packed layout"
    # TODO(synk): n_features that do not divide 128 would need feature-axis
    # padding to the next divisor of 128 (zero-padded features are inert).
    pack = LANES // F
    n_out = pack * n_leaf
    assert ql_packed.shape == (LANES, n_out) and qs_packed.shape == (LANES, n_out)

    # Pad the batch only to the packing quantum (no transposes anywhere).
    bq = pack * SUBLANES
    b_pad = pl.cdiv(B, bq) * bq
    if b_pad != B:
        x = jnp.pad(x, ((0, b_pad - B), (0, 0)))
    rows = b_pad // pack
    xp = x.reshape(rows, LANES)          # free, layout-preserving (row-major)

    block_rows = _pick_block_rows(rows, max_block_rows)
    grid = (rows // block_rows,)

    cost = pl.CostEstimate(
        flops=2 * 2 * rows * LANES * n_out + 6 * rows * LANES,
        transcendentals=2 * rows * LANES + rows * n_out,
        bytes_accessed=4 * (rows * LANES + rows * n_out + 2 * LANES * n_out),
    )

    out = pl.pallas_call(
        _tree_kernel,
        out_shape=jax.ShapeDtypeStruct((rows, n_out), jnp.float32),
        grid=grid,
        in_specs=[
            pl.BlockSpec((block_rows, LANES), lambda i: (i, 0)),   # batch-tiled x
            pl.BlockSpec((LANES, n_out), lambda i: (0, 0)),        # resident constant
            pl.BlockSpec((LANES, n_out), lambda i: (0, 0)),        # resident constant
        ],
        out_specs=pl.BlockSpec((block_rows, n_out), lambda i: (i, 0)),
        compiler_params=pltpu.CompilerParams(
            dimension_semantics=("parallel",)),                    # megacore on v7x
        cost_estimate=cost,
    )(xp, ql_packed, qs_packed)

    # Free reshape back to [b_pad, n_leaf]; drop batch padding.
    return out.reshape(b_pad, n_leaf)[:B]


# ---------------------------------------------------------------------------
# Parameter construction (mirrors Tree.__init__) + constant packing
# ---------------------------------------------------------------------------
def build_tree_params(depth, n_features, n_classes, seed=0):
    n_leaf = 2 ** depth
    rng = np.random.default_rng(seed)
    feature_idx = rng.choice(n_features, n_leaf, replace=False)
    # torch.eye(n_features)[feature_idx].t() -> [n_features, n_leaf]
    feature_mask = np.eye(n_features, dtype=np.float32)[feature_idx].T

    # pi (unused in forward, kept for shape parity with the module)
    pi = np.ones((n_leaf, n_classes), dtype=np.float32) / n_classes

    # Path-membership counts so that  log mu = x @ q_left - softplus(x) @ q_sum:
    #   q_left[f, l] : # of leaf l's path nodes using feature f that go LEFT (d)
    #   q_sum [f, l] : # of leaf l's path nodes using feature f (any direction)
    q_left = np.zeros((n_features, n_leaf), dtype=np.float32)
    q_sum = np.zeros((n_features, n_leaf), dtype=np.float32)
    for k in range(depth):
        for leaf in range(n_leaf):
            node = (1 << k) + (leaf >> (depth - k))   # d column used at layer k
            bit = (leaf >> (depth - 1 - k)) & 1       # 0 -> left (d), 1 -> right (1-d)
            f = int(feature_idx[node])
            if bit == 0:
                q_left[f, leaf] += 1.0
            q_sum[f, leaf] += 1.0
    return feature_mask, pi, feature_idx, q_left, q_sum


def pack_routing(q_left, q_sum):
    """Block-diagonal routing constants for the batch-packed lane layout."""
    n_features, _ = q_left.shape
    assert LANES % n_features == 0
    pack = LANES // n_features
    eye = np.eye(pack, dtype=np.float32)
    return np.kron(eye, q_left), np.kron(eye, q_sum)   # each [128, pack * n_leaf]


# ---------------------------------------------------------------------------
# Pure-JAX reference (direct transcription of the PyTorch forward loop)
# ---------------------------------------------------------------------------
def tree_reference(x, feature_mask, depth):
    feats = x @ feature_mask
    d = jax.nn.sigmoid(feats)[:, :, None]                 # [B, L, 1]
    decision = jnp.concatenate([d, 1.0 - d], axis=2)      # [B, L, 2]
    B = x.shape[0]
    mu = jnp.ones((B, 1, 1), dtype=jnp.float32)
    begin, end = 1, 2
    for n_layer in range(depth):
        mu = jnp.tile(mu, (1, 1, 2))
        mu = mu * decision[:, begin:end, :]
        begin = end
        end = begin + 2 ** (n_layer + 1)
        mu = mu.reshape(B, -1, 1)
    return mu.reshape(B, -1)


# TODO(synk): update_pi / mu_cache are training-time bookkeeping (not part of
# the forward pass) and are intentionally not implemented as a kernel.

if __name__ == "__main__":
    depth = 3          # conf.tree_depth
    n_features = 16    # data.features4tree
    n_classes = 4      # data.c
    batch = 200        # non-multiple of the packing quantum: exercises pad + slice

    feature_mask_np, _pi, _fidx, q_left, q_sum = build_tree_params(
        depth, n_features, n_classes, seed=0)
    ql_p, qs_p = pack_routing(q_left, q_sum)

    key = jax.random.PRNGKey(0)
    x = jax.random.normal(key, (batch, n_features), dtype=jnp.float32)

    fwd = jax.jit(functools.partial(
        tree_forward,
        ql_packed=jnp.asarray(ql_p),
        qs_packed=jnp.asarray(qs_p),
        n_leaf=2 ** depth))

    mu = jax.block_until_ready(fwd(x))
    mu_ref = jax.block_until_ready(
        tree_reference(x, jnp.asarray(feature_mask_np), depth))

    assert mu.shape == (batch, 2 ** depth)
    assert bool(jnp.all(jnp.isfinite(mu)))
    np.testing.assert_allclose(np.asarray(mu), np.asarray(mu_ref),
                               rtol=1e-4, atol=1e-6)
    print("KERNEL_OK")
</pallas_src>

<mosaic_0001>
module attributes {stable_mosaic.version = 11 : i64} {
  func.func @_tree_kernel(%arg0: i32, %arg1: memref<16x128xf32, #tpu.memory_space<vmem>>, %arg2: memref<128x64xf32, #tpu.memory_space<vmem>>, %arg3: memref<128x64xf32, #tpu.memory_space<vmem>>, %arg4: memref<16x64xf32, #tpu.memory_space<vmem>>) attributes {dimension_semantics = [#tpu.dimension_semantics<parallel>], iteration_bounds = array<i64: 2>, scalar_prefetch = 0 : i64, scratch_operands = 0 : i64, tpu.core_type = #tpu.core_type<tc>, window_params = [{transform_indices = @transform_0, window_bounds = array<i64: 16, 128>}, {pipeline_mode = #tpu.pipeline_mode<synchronous>, transform_indices = @transform_1, window_bounds = array<i64: 128, 64>}, {pipeline_mode = #tpu.pipeline_mode<synchronous>, transform_indices = @transform_2, window_bounds = array<i64: 128, 64>}, {transform_indices = @transform_3, window_bounds = array<i64: 16, 64>}]} {
    %c0 = arith.constant 0 : index
    %c0_0 = arith.constant 0 : index
    %0 = vector.load %arg1[%c0, %c0_0] : memref<16x128xf32, #tpu.memory_space<vmem>>, vector<16x128xf32>
    %cst = arith.constant 0.000000e+00 : f32
    %1 = vector.broadcast %cst : f32 to vector<16x128xf32>
    %2 = arith.maximumf %0, %1 : vector<16x128xf32>
    %3 = math.absf %0 : vector<16x128xf32>
    %cst_1 = arith.constant 0.000000e+00 : f32
    %4 = vector.broadcast %cst_1 : f32 to vector<16x128xf32>
    %5 = arith.subf %4, %3 : vector<16x128xf32>
    %6 = math.exp %5 : vector<16x128xf32>
    %cst_2 = arith.constant 1.000000e+00 : f32
    %7 = vector.broadcast %cst_2 : f32 to vector<16x128xf32>
    %8 = arith.addf %7, %6 : vector<16x128xf32>
    %9 = math.log %8 : vector<16x128xf32>
    %10 = arith.addf %2, %9 : vector<16x128xf32>
    %c0_3 = arith.constant 0 : index
    %c0_4 = arith.constant 0 : index
    %11 = vector.load %arg2[%c0_3, %c0_4] : memref<128x64xf32, #tpu.memory_space<vmem>>, vector<128x64xf32>
    %cst_5 = arith.constant dense<0.000000e+00> : vector<16x64xf32>
    %12 = tpu.matmul %0, %11, %cst_5 {dimension_numbers = #tpu.dot_dimension_numbers<[1], [0], [0], [1], [0, 0, 1, 1], [], []>} : vector<16x128xf32>, vector<128x64xf32>, vector<16x64xf32> -> vector<16x64xf32>
    %c0_6 = arith.constant 0 : index
    %c0_7 = arith.constant 0 : index
    %13 = vector.load %arg3[%c0_6, %c0_7] : memref<128x64xf32, #tpu.memory_space<vmem>>, vector<128x64xf32>
    %cst_8 = arith.constant dense<0.000000e+00> : vector<16x64xf32>
    %14 = tpu.matmul %10, %13, %cst_8 {dimension_numbers = #tpu.dot_dimension_numbers<[1], [0], [0], [1], [0, 0, 1, 1], [], []>} : vector<16x128xf32>, vector<128x64xf32>, vector<16x64xf32> -> vector<16x64xf32>
    %15 = arith.subf %12, %14 : vector<16x64xf32>
    %16 = math.exp %15 : vector<16x64xf32>
    %c0_9 = arith.constant 0 : index
    %c0_10 = arith.constant 0 : index
    %17 = vector.load %arg4[%c0_9, %c0_10] : memref<16x64xf32, #tpu.memory_space<vmem>>, vector<16x64xf32>
    tpu.vector_store %arg4[%c0_9, %c0_10], %16 {strides = array<i32>} : memref<16x64xf32, #tpu.memory_space<vmem>>, vector<16x64xf32>,
    return
  }
  func.func @transform_0(%arg0: i32) -> (i32, i32) {
    %c0_i32 = arith.constant 0 : i32
    %c0_i32_0 = arith.constant 0 : i32
    return %arg0, %c0_i32 : i32, i32
  }
  func.func @transform_1(%arg0: i32) -> (i32, i32) {
    %c0_i32 = arith.constant 0 : i32
    %c0_i32_0 = arith.constant 0 : i32
    %c0_i32_1 = arith.constant 0 : i32
    return %c0_i32, %c0_i32_0 : i32, i32
  }
  func.func @transform_2(%arg0: i32) -> (i32, i32) {
    %c0_i32 = arith.constant 0 : i32
    %c0_i32_0 = arith.constant 0 : i32
    %c0_i32_1 = arith.constant 0 : i32
    return %c0_i32, %c0_i32_0 : i32, i32
  }
  func.func @transform_3(%arg0: i32) -> (i32, i32) {
    %c0_i32 = arith.constant 0 : i32
    %c0_i32_0 = arith.constant 0 : i32
    return %arg0, %c0_i32 : i32, i32
  }
}

</mosaic_0001>

<llo_original>
// kernel: tree_forward.1
$region0: #{tree_forward.1}
  #allocation0 [shape = 'u32[]', space=smem, size = 0x4, offset = 0x4, fixed_abs, tag = 'smem constant byte address 0x4 - core index']
  #allocation1 [shape = 'u32[144,128]{1,0:T(1,128)}', space=vmem, size = 0x12000, scoped, tag = 'internal scratch']
  %s0 = inlined_call_operand.vmem [shape: f32[32,128], index: 0, kind: input, shape index: {}]
  %s1 = inlined_call_operand.vmem [shape: f32[128,64], index: 1, kind: input, shape index: {}]
  %s2 = inlined_call_operand.vmem [shape: f32[128,64], index: 2, kind: input, shape index: {}]
  %s3 = inlined_call_operand.vmem [shape: f32[32,64], index: 3, kind: output, shape index: {}]
  %s4 = sld [smem:[#allocation0]]
  $region45: #{tree_forward.1} parent=0
    _
  %s6 = ssub.s32 1, %s4
  %s7 = scalar_select 0, %s6, %s4
  loop: start=0, step=1, limit=4
  $region2: #{tree_forward.1} parent=0 // loop_pre_header
    _
  $region3: #{tree_forward.1} parent=0 // loop_header
    %s9 = sphi 0, %s13
    %p10 = scmp.ge.s32.totalorder %s9, 4
    %s19 = sphi 0, %s21
    %s22 = sphi 0, %s19
    %s23 = sphi 0, %s22
    %s39 = sphi 0, %s23
    %s43 = sphi 0, %s43
    %s45 = sphi 0, %s43
    %s46 = sphi 0, %s45
    %s60 = sphi 0, %s46
    %s64 = sphi 0, %s64
    %s66 = sphi 0, %s64
    %s67 = sphi 0, %s66
    %s81 = sphi 0, %s67
    %s87 = sphi 0, %s89
    %s90 = sphi 0, %s87
    %s91 = sphi 0, %s90
    %s107 = sphi 0, %s91
  $region4: #{tree_forward.1} parent=0 // loop_header_branch
    %12 = sbr.rel (%p10) target = $region8
  $region5: #{tree_forward.1} parent=0 // loop_body
    %s14 = ssub.s32 %s9, 1
    %s15 = ssub.s32 %s9, 2
    %s16 = sadd.s32 %s9, 1
    %s17 = ssub.s32 %s9, %s16
    %p18 = scmp.eq.s32.totalorder %s17, 0
    %s20 = sadd.s32 %s19, 1
    %s21 = scalar_select %p18, %s19, %s20
    %p24 = pneg %p18
    %p25 = scmp.eq.s32.totalorder %s9, 1
    %p26 = por %p24, %p25
    %p27 = scmp.ne.s32.totalorder %s19, %s22
    %p28 = scmp.eq.s32.totalorder %s9, 0
    %p29 = por %p27, %p28
    %p30 = scmp.ne.s32.totalorder %s19, %s22
    %p31 = scmp.eq.s32.totalorder %s14, 1
    %p32 = por %p30, %p31
    %p33 = scmp.ne.s32.totalorder %s22, %s23
    %p34 = scmp.eq.s32.totalorder %s14, 0
    %p35 = por %p33, %p34
    %p36 = scmp.ne.s32.totalorder %s22, %s23
    %p37 = scmp.eq.s32.totalorder %s15, 1
    %p38 = por %p36, %p37
    %p40 = scmp.ne.s32.totalorder %s23, %s39
    %p41 = scmp.eq.s32.totalorder %s15, 0
    %p42 = por %p40, %p41
    %s44 = sadd.s32 %s43, 1
    %p47 = scmp.eq.s32.totalorder %s9, 1
    %p48 = scmp.ne.s32.totalorder %s43, %s45
    %p49 = scmp.eq.s32.totalorder %s9, 0
    %p50 = por %p48, %p49
    %p51 = scmp.ne.s32.totalorder %s43, %s45
    %p52 = scmp.eq.s32.totalorder %s14, 1
    %p53 = por %p51, %p52
    %p54 = scmp.ne.s32.totalorder %s45, %s46
    %p55 = scmp.eq.s32.totalorder %s14, 0
    %p56 = por %p54, %p55
    %p57 = scmp.ne.s32.totalorder %s45, %s46
    %p58 = scmp.eq.s32.totalorder %s15, 1
    %p59 = por %p57, %p58
    %p61 = scmp.ne.s32.totalorder %s46, %s60
    %p62 = scmp.eq.s32.totalorder %s15, 0
    %p63 = por %p61, %p62
    %s65 = sadd.s32 %s64, 1
    %p68 = scmp.eq.s32.totalorder %s9, 1
    %p69 = scmp.ne.s32.totalorder %s64, %s66
    %p70 = scmp.eq.s32.totalorder %s9, 0
    %p71 = por %p69, %p70
    %p72 = scmp.ne.s32.totalorder %s64, %s66
    %p73 = scmp.eq.s32.totalorder %s14, 1
    %p74 = por %p72, %p73
    %p75 = scmp.ne.s32.totalorder %s66, %s67
    %p76 = scmp.eq.s32.totalorder %s14, 0
    %p77 = por %p75, %p76
    %p78 = scmp.ne.s32.totalorder %s66, %s67
    %p79 = scmp.eq.s32.totalorder %s15, 1
    %p80 = por %p78, %p79
    %p82 = scmp.ne.s32.totalorder %s67, %s81
    %p83 = scmp.eq.s32.totalorder %s15, 0
    %p84 = por %p82, %p83
    %s85 = ssub.s32 %s9, %s16
    %p86 = scmp.eq.s32.totalorder %s85, 0
    %s88 = sadd.s32 %s87, 1
    %s89 = scalar_select %p86, %s87, %s88
    %p92 = pneg %p86
    %p93 = scmp.eq.s32.totalorder %s9, 1
    %p94 = por %p92, %p93
    %p95 = scmp.ne.s32.totalorder %s87, %s90
    %p96 = scmp.eq.s32.totalorder %s9, 0
    %p97 = por %p95, %p96
    %p98 = scmp.ne.s32.totalorder %s87, %s90
    %p99 = scmp.eq.s32.totalorder %s14, 1
    %p100 = por %p98, %p99
    %p101 = scmp.ne.s32.totalorder %s90, %s91
    %p102 = scmp.eq.s32.totalorder %s14, 0
    %p103 = por %p101, %p102
    %p104 = scmp.ne.s32.totalorder %s90, %s91
    %p105 = scmp.eq.s32.totalorder %s15, 1
    %p106 = por %p104, %p105
    %p108 = scmp.ne.s32.totalorder %s91, %s107
    %p109 = scmp.eq.s32.totalorder %s15, 0
    %p110 = por %p108, %p109
    %p111 = scmp.le.s32.totalorder 1, %s9
    %p112 = scmp.lt.s32.totalorder %s9, 3
    %p113 = pnand %p111, %p112
    %p114 = pneg %p113
    // Predicated region
    $region9: #{tree_forward.1} parent=5 // pred_check
      _
    $region10: #{tree_forward.1} parent=5 // pred_check_branch
      %116 = sbr.rel (%p113) target = $region12
    $region11: #{tree_forward.1} parent=5 // pred_region
      %s117 = ssub.s32 %s9, 1
      // Predicated region
      $region13: #{tree_forward.1} parent=11 // pred_check
        %p118 = pneg %p56
      $region14: #{tree_forward.1} parent=11 // pred_check_branch
        %120 = sbr.rel (%p118) target = $region16
      $region15: #{tree_forward.1} parent=11 // pred_region
        _
      $region16: #{tree_forward.1} parent=11 // pred_fallthru
        _
      // Predicated region
      $region17: #{tree_forward.1} parent=11 // pred_check
        %p121 = pneg %p77
      $region18: #{tree_forward.1} parent=11 // pred_check_branch
        %123 = sbr.rel (%p121) target = $region20
      $region19: #{tree_forward.1} parent=11 // pred_region
        _
      $region20: #{tree_forward.1} parent=11 // pred_fallthru
        _
    $region12: #{tree_forward.1} parent=5 // pred_fallthru
      _
    %p124 = scmp.lt.s32.totalorder %s9, 2
    // Predicated region
    $region21: #{tree_forward.1} parent=5 // pred_check
      %p125 = pneg %p124
    $region22: #{tree_forward.1} parent=5 // pred_check_branch
      %127 = sbr.rel (%p125) target = $region24
    $region23: #{tree_forward.1} parent=5 // pred_region
      // Predicated region
      $region25: #{tree_forward.1} parent=23 // pred_check
        %p128 = pneg %p29
      $region26: #{tree_forward.1} parent=23 // pred_check_branch
        %130 = sbr.rel (%p128) target = $region28
      $region27: #{tree_forward.1} parent=23 // pred_region
        %s131 = smul.u32 2, %s9
        %p132 = scmp.lt.s32.totalorder %s131, 3
        %s133 = scalar_select %p132, %s131, 3
        %s134 = smul.addr %s133, 8
        %s135 = scalar_lea.vmem %s0, %s134
        %s136 = smul.u32 2, %s9
      $region28: #{tree_forward.1} parent=23 // pred_fallthru
        _
    $region24: #{tree_forward.1} parent=5 // pred_fallthru
      _
    %p137 = scmp.le.s32.totalorder 1, %s9
    %p138 = scmp.lt.s32.totalorder %s9, 3
    %p139 = pnand %p137, %p138
    %p140 = pneg %p139
    // Predicated region
    $region29: #{tree_forward.1} parent=5 // pred_check
      _
    $region30: #{tree_forward.1} parent=5 // pred_check_branch
      %142 = sbr.rel (%p139) target = $region32
    $region31: #{tree_forward.1} parent=5 // pred_region
      %s143 = ssub.s32 %s9, 1
      %s144 = smul.u32 2, %s14
      %p145 = scmp.lt.s32.totalorder %s144, 3
      %s146 = scalar_select %p145, %s144, 3
      %s147 = smul.addr %s146, 8
      %s148 = scalar_lea.vmem %s0, %s147
      %p149 = pneg %p35
      %p150 = pneg %p32
      %p151 = pneg %p56
      %p152 = pneg %p53
      %p153 = pneg %p77
      %p154 = pneg %p74
      %p155 = pneg %p103
      %p156 = pneg %p100
      %s157 = smul.u32 2, %s14
      %p158 = scmp.lt.s32.totalorder %s157, 3
      %s159 = scalar_select %p158, %s157, 3
      %s160 = smul.addr %s159, 8
      %s161 = scalar_lea.vmem %s3, %s160
      %s162 = smul.u32 2, %s14
      %p163 = scmp.lt.s32.totalorder %s162, 3
      %s164 = scalar_select %p163, %s162, 3
      %s165 = smul.addr %s164, 8
      %s166 = scalar_lea.vmem %s0, %s165
      %s167 = smul.u32 2, %s14
      %s168 = smul.u32 2, %s14
      %p169 = scmp.lt.s32.totalorder %s168, 3
      %s170 = scalar_select %p169, %s168, 3
      %s171 = smul.addr %s170, 8
      %s172 = scalar_lea.vmem %s3, %s171
      %s173 = smul.u32 2, %s14
      %v174 = vld [vmem:[%s166] sm:$0xff]
      %v175 = vld [vmem:[%s166 + $0x8] sm:$0xff]
      %v176 = vmax.f32 %v174, 0.0
      %v177 = vmax.f32 %v175, 0.0
      %v178 = vand.u32 2147483647, %v174
      %v179 = vand.u32 2147483647, %v175
      %v180 = vsub.f32 0.0, %v178
      %v181 = vsub.f32 0.0, %v179
      %v182 = vmul.f32 %v180, 1.442695
      %v183 = vpow.pop %v182
      %v184 = vmul.f32 %v181, 1.442695
      %v185 = vpow.pop %v184
      %v186 = vadd.f32 %v183, 1.0
      %v187 = vadd.f32 %v185, 1.0
      %v188 = vlog2.pop %v186
      %v189 = vmul.f32 %v188, 0.6931472
      %v190 = vlog2.pop %v187
      %v191 = vmul.f32 %v190, 0.6931472
      %v192 = vadd.f32 %v176, %v189
      %v193 = vadd.f32 %v177, %v191
      %v194 = vld [vmem:[%s1] sm:$0xff]
      %v195 = vld [vmem:[%s1 + $0x8] sm:$0xff]
      %v196 = vld [vmem:[%s1 + $0x10] sm:$0xff]
      %v197 = vld [vmem:[%s1 + $0x18] sm:$0xff]
      %v198 = vld [vmem:[%s1 + $0x20] sm:$0xff]
      %v199 = vld [vmem:[%s1 + $0x28] sm:$0xff]
      %v200 = vld [vmem:[%s1 + $0x30] sm:$0xff]
      %v201 = vld [vmem:[%s1 + $0x38] sm:$0xff]
      %v202 = vld [vmem:[%s1 + $0x40] sm:$0xff]
      %v203 = vld [vmem:[%s1 + $0x48] sm:$0xff]
      %v204 = vld [vmem:[%s1 + $0x50] sm:$0xff]
      %v205 = vld [vmem:[%s1 + $0x58] sm:$0xff]
      %v206 = vld [vmem:[%s1 + $0x60] sm:$0xff]
      %v207 = vld [vmem:[%s1 + $0x68] sm:$0xff]
      %v208 = vld [vmem:[%s1 + $0x70] sm:$0xff]
      %v209 = vld [vmem:[%s1 + $0x78] sm:$0xff]
      %210 = vmatprep.subr.mxu0 0.0
      %211 = vmatpush1.msra.mxu0 %v194
      %212 = vmatprep.subr.mxu0 0.0
      %213 = vmatpush1.msra.mxu0 %v195
      %214 = vmatprep.subr.mxu0 0.0
      %215 = vmatpush1.msra.mxu0 %v196
      %216 = vmatprep.subr.mxu0 0.0
      %217 = vmatpush1.msra.mxu0 %v197
      %218 = vmatprep.subr.mxu0 0.0
      %219 = vmatpush1.msra.mxu0 %v198
      %220 = vmatprep.subr.mxu0 0.0
      %221 = vmatpush1.msra.mxu0 %v199
      %222 = vmatprep.subr.mxu0 0.0
      %223 = vmatpush1.msra.mxu0 %v200
      %224 = vmatprep.subr.mxu0 0.0
      %225 = vmatpush1.msra.mxu0 %v201
      %226 = vmatprep.subr.mxu0 0.0
      %227 = vmatpush1.msra.mxu0 %v202
      %228 = vmatprep.subr.mxu0 0.0
      %229 = vmatpush1.msra.mxu0 %v203
      %230 = vmatprep.subr.mxu0 0.0
      %231 = vmatpush1.msra.mxu0 %v204
      %232 = vmatprep.subr.mxu0 0.0
      %233 = vmatpush1.msra.mxu0 %v205
      %234 = vmatprep.subr.mxu0 0.0
      %235 = vmatpush1.msra.mxu0 %v206
      %236 = vmatprep.subr.mxu0 0.0
      %237 = vmatpush1.msra.mxu0 %v207
      %238 = vmatprep.subr.mxu0 0.0
      %239 = vmatpush1.msra.mxu0 %v208
      %240 = vmatprep.subr.mxu0 0.0
      %241 = vmatpush1.msra.mxu0 %v209
      %242 = vmatprep.subr.mxu0 0.0
      %243 = vmatpush1.msra.mxu0 0.0
      %244 = vmatprep.subr.mxu0 0.0
      %245 = vmatpush1.msra.mxu0 0.0
      %246 = vmatprep.subr.mxu0 0.0
      %247 = vmatpush1.msra.mxu0 0.0
      %248 = vmatprep.subr.mxu0 0.0
      %249 = vmatpush1.msra.mxu0 0.0
      %250 = vmatprep.subr.mxu0 0.0
      %251 = vmatpush1.msra.mxu0 0.0
      %252 = vmatprep.subr.mxu0 0.0
      %253 = vmatpush1.msra.mxu0 0.0
      %254 = vmatprep.subr.mxu0 0.0
      %255 = vmatpush1.msra.mxu0 0.0
      %256 = vmatprep.subr.mxu0 0.0
      %257 = vmatpush1.msra.mxu0 0.0
      %258 = vmatprep.subr.mxu0 0.0
      %259 = vmatpush1.msra.mxu0 0.0
      %260 = vmatprep.subr.mxu0 0.0
      %261 = vmatpush1.msra.mxu0 0.0
      %262 = vmatprep.subr.mxu0 0.0
      %263 = vmatpush1.msra.mxu0 0.0
      %264 = vmatprep.subr.mxu0 0.0
      %265 = vmatpush1.msra.mxu0 0.0
      %266 = vmatprep.subr.mxu0 0.0
      %267 = vmatpush1.msra.mxu0 0.0
      %268 = vmatprep.subr.mxu0 0.0
      %269 = vmatpush1.msra.mxu0 0.0
      %270 = vmatprep.subr.mxu0 0.0
      %271 = vmatpush1.msra.mxu0 0.0
      %272 = vmatprep.subr.mxu0 0.0
      %273 = vmatpush1.msra.mxu0 0.0
      %274 = vmatprep.mubr.f32.mxu0 0.0
      %275 = vmatmul.mubr.f32.gmra.mrb[0].mxu0 %v174
      %v276 = vpop.f32.mrb[0].mxu0
      %v277 = vadd.f32 0.0, %v276
      %v278 = vpop.f32.mrb[0].mxu0
      %279 = vmatprep.mubr.f32.mxu0 0.0
      %280 = vmatmul.mubr.f32.gmra.mrb[0].mxu0 %v175
      %v281 = vpop.f32.mrb[0].mxu0
      %v282 = vadd.f32 0.0, %v281
      %v283 = vpop.f32.mrb[0].mxu0
      %284 = vdwg.mxu0
      %v285 = vld [vmem:[%s2] sm:$0xff]
      %v286 = vld [vmem:[%s2 + $0x8] sm:$0xff]
      %v287 = vld [vmem:[%s2 + $0x10] sm:$0xff]
      %v288 = vld [vmem:[%s2 + $0x18] sm:$0xff]
      %v289 = vld [vmem:[%s2 + $0x20] sm:$0xff]
      %v290 = vld [vmem:[%s2 + $0x28] sm:$0xff]
      %v291 = vld [vmem:[%s2 + $0x30] sm:$0xff]
      %v292 = vld [vmem:[%s2 + $0x38] sm:$0xff]
      %v293 = vld [vmem:[%s2 + $0x40] sm:$0xff]
      %v294 = vld [vmem:[%s2 + $0x48] sm:$0xff]
      %v295 = vld [vmem:[%s2 + $0x50] sm:$0xff]
      %v296 = vld [vmem:[%s2 + $0x58] sm:$0xff]
      %v297 = vld [vmem:[%s2 + $0x60] sm:$0xff]
      %v298 = vld [vmem:[%s2 + $0x68] sm:$0xff]
      %v299 = vld [vmem:[%s2 + $0x70] sm:$0xff]
      %v300 = vld [vmem:[%s2 + $0x78] sm:$0xff]
      %301 = vmatprep.subr.mxu0 0.0
      %302 = vmatpush1.msra.mxu0 %v285
      %303 = vmatprep.subr.mxu0 0.0
      %304 = vmatpush1.msra.mxu0 %v286
      %305 = vmatprep.subr.mxu0 0.0
      %306 = vmatpush1.msra.mxu0 %v287
      %307 = vmatprep.subr.mxu0 0.0
      %308 = vmatpush1.msra.mxu0 %v288
      %309 = vmatprep.subr.mxu0 0.0
      %310 = vmatpush1.msra.mxu0 %v289
      %311 = vmatprep.subr.mxu0 0.0
      %312 = vmatpush1.msra.mxu0 %v290
      %313 = vmatprep.subr.mxu0 0.0
      %314 = vmatpush1.msra.mxu0 %v291
      %315 = vmatprep.subr.mxu0 0.0
      %316 = vmatpush1.msra.mxu0 %v292
      %317 = vmatprep.subr.mxu0 0.0
      %318 = vmatpush1.msra.mxu0 %v293
      %319 = vmatprep.subr.mxu0 0.0
      %320 = vmatpush1.msra.mxu0 %v294
      %321 = vmatprep.subr.mxu0 0.0
      %322 = vmatpush1.msra.mxu0 %v295
      %323 = vmatprep.subr.mxu0 0.0
      %324 = vmatpush1.msra.mxu0 %v296
      %325 = vmatprep.subr.mxu0 0.0
      %326 = vmatpush1.msra.mxu0 %v297
      %327 = vmatprep.subr.mxu0 0.0
      %328 = vmatpush1.msra.mxu0 %v298
      %329 = vmatprep.subr.mxu0 0.0
      %330 = vmatpush1.msra.mxu0 %v299
      %331 = vmatprep.subr.mxu0 0.0
      %332 = vmatpush1.msra.mxu0 %v300
      %333 = vmatprep.subr.mxu0 0.0
      %334 = vmatpush1.msra.mxu0 0.0
      %335 = vmatprep.subr.mxu0 0.0
      %336 = vmatpush1.msra.mxu0 0.0
      %337 = vmatprep.subr.mxu0 0.0
      %338 = vmatpush1.msra.mxu0 0.0
      %339 = vmatprep.subr.mxu0 0.0
      %340 = vmatpush1.msra.mxu0 0.0
      %341 = vmatprep.subr.mxu0 0.0
      %342 = vmatpush1.msra.mxu0 0.0
      %343 = vmatprep.subr.mxu0 0.0
      %344 = vmatpush1.msra.mxu0 0.0
      %345 = vmatprep.subr.mxu0 0.0
      %346 = vmatpush1.msra.mxu0 0.0
      %347 = vmatprep.subr.mxu0 0.0
      %348 = vmatpush1.msra.mxu0 0.0
      %349 = vmatprep.subr.mxu0 0.0
      %350 = vmatpush1.msra.mxu0 0.0
      %351 = vmatprep.subr.mxu0 0.0
      %352 = vmatpush1.msra.mxu0 0.0
      %353 = vmatprep.subr.mxu0 0.0
      %354 = vmatpush1.msra.mxu0 0.0
      %355 = vmatprep.subr.mxu0 0.0
      %356 = vmatpush1.msra.mxu0 0.0
      %357 = vmatprep.subr.mxu0 0.0
      %358 = vmatpush1.msra.mxu0 0.0
      %359 = vmatprep.subr.mxu0 0.0
      %360 = vmatpush1.msra.mxu0 0.0
      %361 = vmatprep.subr.mxu0 0.0
      %362 = vmatpush1.msra.mxu0 0.0
      %363 = vmatprep.subr.mxu0 0.0
      %364 = vmatpush1.msra.mxu0 0.0
      %365 = vmatprep.mubr.f32.mxu0 0.0
      %366 = vmatmul.mubr.f32.gmra.mrb[0].mxu0 %v192
      %v367 = vpop.f32.mrb[0].mxu0
      %v368 = vadd.f32 0.0, %v367
      %v369 = vpop.f32.mrb[0].mxu0
      %370 = vmatprep.mubr.f32.mxu0 0.0
      %371 = vmatmul.mubr.f32.gmra.mrb[0].mxu0 %v193
      %v372 = vpop.f32.mrb[0].mxu0
      %v373 = vadd.f32 0.0, %v372
      %v374 = vpop.f32.mrb[0].mxu0
      %375 = vdwg.mxu0
      %v376 = vsub.f32 %v277, %v368
      %v377 = vsub.f32 %v282, %v373
      %v378 = vmul.f32 %v376, 1.442695
      %v379 = vpow.pop %v378
      %v380 = vmul.f32 %v377, 1.442695
      %v381 = vpow.pop %v380
      %vm382 = vcmask 523264
      %383 = vst.msk [vmem:[%s172] sm:$0xff] %vm382, %v379
      %384 = vst.msk [vmem:[%s172 + $0x8] sm:$0xff] %vm382, %v381
      %s385 = smul.u32 2, %s14
      %p386 = scmp.lt.s32.totalorder %s385, 3
      %s387 = scalar_select %p386, %s385, 3
      %s388 = smul.addr %s387, 8
      %s389 = scalar_lea.vmem %s3, %s388
      // Predicated region
      $region33: #{tree_forward.1} parent=31 // pred_check
        %p390 = pneg %p100
      $region34: #{tree_forward.1} parent=31 // pred_check_branch
        %392 = sbr.rel (%p390) target = $region36
      $region35: #{tree_forward.1} parent=31 // pred_region
        %s393 = smul.u32 2, %s14
      $region36: #{tree_forward.1} parent=31 // pred_fallthru
        _
    $region32: #{tree_forward.1} parent=5 // pred_fallthru
      _
    %p394 = scmp.le.s32.totalorder 2, %s9
    // Predicated region
    $region37: #{tree_forward.1} parent=5 // pred_check
      %p395 = pneg %p394
    $region38: #{tree_forward.1} parent=5 // pred_check_branch
      %397 = sbr.rel (%p395) target = $region40
    $region39: #{tree_forward.1} parent=5 // pred_region
      %s398 = ssub.s32 %s9, 2
      // Predicated region
      $region41: #{tree_forward.1} parent=39 // pred_check
        %p399 = pneg %p106
      $region42: #{tree_forward.1} parent=39 // pred_check_branch
        %401 = sbr.rel (%p399) target = $region44
      $region43: #{tree_forward.1} parent=39 // pred_region
        %s402 = smul.u32 2, %s15
        %p403 = scmp.lt.s32.totalorder %s402, 3
        %s404 = scalar_select %p403, %s402, 3
        %s405 = smul.addr %s404, 8
        %s406 = scalar_lea.vmem %s3, %s405
      $region44: #{tree_forward.1} parent=39 // pred_fallthru
        _
    $region40: #{tree_forward.1} parent=5 // pred_fallthru
      _
  $region6: #{tree_forward.1} parent=0 // loop_footer
    %s13 = sadd.s32 1, %s9
  $region7: #{tree_forward.1} parent=0 // loop_footer_branch
    %8 = sbr.rel target = $region3
  $region8: #{tree_forward.1} parent=0 // loop_exit
    _

</llo_original>
